<compile_context>
chip_gen: v6e
topology: v6e:2x2x1
jax: 0.10.0
libtpu: 0.0.40
codegen_flags: <defaults>
</compile_context>

<pallas_src>
import functools

import jax
import jax.numpy as jnp
from jax.experimental import pallas as pl
from jax.experimental.pallas import tpu as pltpu

LANE = 128


def _round_up(x, m):
    return (x + m - 1) // m * m


# -----------------------------------------------------------------------------
# Fused kernel: patch-embed matmul -> GELU -> f32 mean-pool (sublane sum) -> MLP
# -----------------------------------------------------------------------------
def _fused_kernel(x_ref, wp_ref, bp_ref, w1_ref, b1_ref, w2_ref, b2_ref, o_ref):
    bm, P, K = x_ref.shape
    Dp = wp_ref.shape[1]

    # ---- patch embed: flat 2-D matmul, bf16 inputs / f32 accumulation --------
    x = x_ref[...].reshape(bm * P, K)                                # bf16 (bm*P, K)
    emb = jnp.dot(x, wp_ref[...],
                  preferred_element_type=jnp.float32) + bp_ref[...]  # f32 (bm*P, Dp)

    # Tanh-approximate GELU keeps the transcendental on the EUP path.
    # TODO(synk): torch.nn.GELU defaults to the exact erf form (~1e-3 drift).
    emb = jax.nn.gelu(emb, approximate=True)

    # ---- mean pool over patches: f32 sublane-axis reduction (XLU), no MXU ----
    feats = emb.reshape(bm, P, Dp).sum(axis=1) * (1.0 / P)           # f32 (bm, Dp)

    # ---- vim_model: Linear -> ReLU -> Linear ---------------------------------
    h = jnp.dot(feats.astype(jnp.bfloat16), w1_ref[...],
                preferred_element_type=jnp.float32) + b1_ref[...]
    h = jnp.maximum(h, 0.0)
    o_ref[...] = jnp.dot(h.astype(jnp.bfloat16), w2_ref[...],
                         preferred_element_type=jnp.float32) + b2_ref[...]


# -----------------------------------------------------------------------------
# Params
# -----------------------------------------------------------------------------
def init_params(key, in_ch=4, patch=4, embed_dim=32, hidden=64, num_classes=10):
    """Unpadded f32 params, matching the PyTorch submodules."""
    k1, k2, k3 = jax.random.split(key, 3)
    K = in_ch * patch * patch
    return {
        # patch-embed "conv" weight, flattened to (C*ph*pw, D) in Conv2d (C, kh, kw) order
        "w_patch": (1.0 / jnp.sqrt(K)) * jax.random.normal(k1, (K, embed_dim), jnp.float32),
        "b_patch": jnp.zeros((1, embed_dim), jnp.float32),
        # vim_model MLP head
        "w1": (1.0 / jnp.sqrt(embed_dim)) * jax.random.normal(k2, (embed_dim, hidden), jnp.float32),
        "b1": jnp.zeros((1, hidden), jnp.float32),
        "w2": (1.0 / jnp.sqrt(hidden)) * jax.random.normal(k3, (hidden, num_classes), jnp.float32),
        "b2": jnp.zeros((1, num_classes), jnp.float32),
    }


def prepare_params(params):
    """One-time: zero-pad weight *output* lane dims to 128, cast matmul weights to bf16.

    The patch-embed contraction dim K is deliberately left unpadded (it is the
    full last dim of the activation; padding it only doubles activation DMA bytes).
    """
    def pad2(w, r, c):
        return jnp.pad(w, ((0, r - w.shape[0]), (0, c - w.shape[1])))

    K, D = params["w_patch"].shape
    H = params["w1"].shape[1]
    Cn = params["w2"].shape[1]
    Dp, Hp, Cp = (_round_up(d, LANE) for d in (D, H, Cn))
    return {
        "w_patch": pad2(params["w_patch"], K, Dp).astype(jnp.bfloat16),
        "b_patch": pad2(params["b_patch"], 1, Dp),                 # f32
        "w1": pad2(params["w1"], Dp, Hp).astype(jnp.bfloat16),
        "b1": pad2(params["b1"], 1, Hp),                           # f32
        "w2": pad2(params["w2"], Hp, Cp).astype(jnp.bfloat16),
        "b2": pad2(params["b2"], 1, Cp),                           # f32
    }


def _pick_block_b(B, P, K, Dp):
    """Batch block size: sublane-aligned, VMEM-budgeted, and >=2 grid steps for big B."""
    Bp = _round_up(max(B, 8), 8)
    # Cap block_b so the f32 emb intermediate + double-buffered patch input stays
    # well under the scoped VMEM limit (16 MiB v5e, 32 MiB v6e/v7x default; v7x has
    # only 64 MiB physical VMEM per TC).
    cap = 128
    while cap > 8 and (cap * P * Dp * 4 + 2 * cap * P * K * 2) > (16 << 20):
        cap //= 2
    if B >= 16:
        # Give the "parallel" batch axis >= 2 steps so v7x's two TensorCores both work.
        block_b = min(cap, max(8, _round_up(_round_up(B, 16) // 2, 8)))
    else:
        block_b = min(cap, Bp)
    Bp = _round_up(Bp, block_b)
    return block_b, Bp


# -----------------------------------------------------------------------------
# SerialModel.forward: vim_model(feature_extractor(x)) -- single fused kernel
# -----------------------------------------------------------------------------
def serial_model_forward(x_nchw, pparams, num_classes, patch=4):
    B, C, Hh, Ww = x_nchw.shape
    ph = pw = patch
    P = (Hh // ph) * (Ww // pw)
    K = C * ph * pw

    wp, bp = pparams["w_patch"], pparams["b_patch"]
    w1, b1 = pparams["w1"], pparams["b1"]
    w2, b2 = pparams["w2"], pparams["b2"]
    Dp = wp.shape[1]
    Hp = w1.shape[1]
    Cp = w2.shape[1]

    block_b, Bp = _pick_block_b(B, P, K, Dp)

    # Unfold NCHW into non-overlapping patches, flattened in (C, kh, kw) order so the
    # patch-embed conv becomes a plain matmul against the flattened Conv2d weight.
    # With jit + allow_input_fusion on this operand, XLA can fuse the unfold/pad/cast
    # into the pallas_call input DMA instead of materializing `patches` in HBM.
    xp = x_nchw.reshape(B, C, Hh // ph, ph, Ww // pw, pw)
    xp = xp.transpose(0, 2, 4, 1, 3, 5)                              # (B, Hp, Wp, C, ph, pw)
    patches = xp.reshape(B, P, K)
    patches = jnp.pad(patches, ((0, Bp - B), (0, 0), (0, 0))).astype(jnp.bfloat16)

    # Per-step VMEM working set (double-buffered inputs/outputs + f32 emb intermediate).
    working = (2 * block_b * P * K * 2
               + block_b * P * Dp * 4
               + 2 * block_b * Cp * 4
               + 2 * (K * Dp + Dp * Hp + Hp * Cp) * 2
               + 2 * (Dp + Hp + Cp) * 4)
    vmem_limit = int(min(64 << 20, max(16 << 20, 2 * working)))

    def full(shape):
        return pl.BlockSpec(shape, lambda i: tuple(0 for _ in shape))

    out = pl.pallas_call(
        _fused_kernel,
        out_shape=jax.ShapeDtypeStruct((Bp, Cp), jnp.float32),
        grid=(Bp // block_b,),
        in_specs=[pl.BlockSpec((block_b, P, K), lambda i: (i, 0, 0)),
                  full((K, Dp)), full((1, Dp)),
                  full((Dp, Hp)), full((1, Hp)),
                  full((Hp, Cp)), full((1, Cp))],
        out_specs=pl.BlockSpec((block_b, Cp), lambda i: (i, 0)),
        compiler_params=pltpu.CompilerParams(
            dimension_semantics=("parallel",),
            vmem_limit_bytes=vmem_limit,
            allow_input_fusion=[True, False, False, False, False, False, False]),
    )(patches, wp, bp, w1, b1, w2, b2)

    return out[:B, :num_classes]


if __name__ == "__main__":
    key = jax.random.PRNGKey(0)
    kx, kp = jax.random.split(key)

    B, C, H, W = 2, 4, 16, 16            # small NCHW input, patch=4 -> P=16 patches
    PATCH, EMBED, HIDDEN, NUM_CLASSES = 4, 32, 64, 10
    x = jax.random.normal(kx, (B, C, H, W), jnp.float32)

    params = init_params(kp, in_ch=C, patch=PATCH, embed_dim=EMBED,
                         hidden=HIDDEN, num_classes=NUM_CLASSES)
    pparams = prepare_params(params)

    fwd = jax.jit(serial_model_forward, static_argnums=(2, 3))
    out = fwd(x, pparams, NUM_CLASSES, PATCH)
    out = jax.block_until_ready(out)

    # ---- Pure-JAX reference of the same fused math (same bf16 casts, f32 mean) ----
    P = (H // PATCH) * (W // PATCH)
    K = C * PATCH * PATCH
    xp = x.reshape(B, C, H // PATCH, PATCH, W // PATCH, PATCH).transpose(0, 2, 4, 1, 3, 5)
    patches_ref = xp.reshape(B * P, K).astype(jnp.bfloat16)
    emb = jnp.dot(patches_ref, params["w_patch"].astype(jnp.bfloat16),
                  preferred_element_type=jnp.float32) + params["b_patch"]
    emb = jax.nn.gelu(emb, approximate=True)
    feats = emb.reshape(B, P, -1).mean(axis=1)                       # f32 mean
    h = jnp.maximum(jnp.dot(feats.astype(jnp.bfloat16), params["w1"].astype(jnp.bfloat16),
                            preferred_element_type=jnp.float32) + params["b1"], 0.0)
    ref_bf16 = jnp.dot(h.astype(jnp.bfloat16), params["w2"].astype(jnp.bfloat16),
                       preferred_element_type=jnp.float32) + params["b2"]
    assert jnp.allclose(out, ref_bf16, atol=2e-3, rtol=2e-3), "mismatch vs bf16-matched reference"

    # Loose sanity check against the full-f32 (unquantized) model math.
    emb32 = jax.nn.gelu(xp.reshape(B, P, K) @ params["w_patch"] + params["b_patch"][None],
                        approximate=True)
    feats32 = jnp.mean(emb32, axis=1)
    ref_f32 = jnp.maximum(feats32 @ params["w1"] + params["b1"], 0.0) @ params["w2"] + params["b2"]
    assert jnp.allclose(out, ref_f32, atol=5e-2, rtol=5e-2), "gross mismatch vs f32 reference"

    assert out.shape == (B, NUM_CLASSES) and out.dtype == jnp.float32
    print("KERNEL_OK")
</pallas_src>

<mosaic_0001>
module attributes {stable_mosaic.version = 11 : i64} {
  func.func @_fused_kernel(%arg0: i32, %arg1: memref<8x16x64xbf16, #tpu.memory_space<vmem>>, %arg2: memref<64x128xbf16, #tpu.memory_space<vmem>>, %arg3: memref<1x128xf32, #tpu.memory_space<vmem>>, %arg4: memref<128x128xbf16, #tpu.memory_space<vmem>>, %arg5: memref<1x128xf32, #tpu.memory_space<vmem>>, %arg6: memref<128x128xbf16, #tpu.memory_space<vmem>>, %arg7: memref<1x128xf32, #tpu.memory_space<vmem>>, %arg8: memref<8x128xf32, #tpu.memory_space<vmem>>) attributes {dimension_semantics = [#tpu.dimension_semantics<parallel>], iteration_bounds = array<i64: 1>, scalar_prefetch = 0 : i64, scratch_operands = 0 : i64, tpu.core_type = #tpu.core_type<tc>, window_params = [{transform_indices = @transform_0, window_bounds = array<i64: 8, 16, 64>}, {pipeline_mode = #tpu.pipeline_mode<synchronous>, transform_indices = @transform_1, window_bounds = array<i64: 64, 128>}, {pipeline_mode = #tpu.pipeline_mode<synchronous>, transform_indices = @transform_2, window_bounds = array<i64: 1, 128>}, {pipeline_mode = #tpu.pipeline_mode<synchronous>, transform_indices = @transform_3, window_bounds = array<i64: 128, 128>}, {pipeline_mode = #tpu.pipeline_mode<synchronous>, transform_indices = @transform_4, window_bounds = array<i64: 1, 128>}, {pipeline_mode = #tpu.pipeline_mode<synchronous>, transform_indices = @transform_5, window_bounds = array<i64: 128, 128>}, {pipeline_mode = #tpu.pipeline_mode<synchronous>, transform_indices = @transform_6, window_bounds = array<i64: 1, 128>}, {transform_indices = @transform_7, window_bounds = array<i64: 8, 128>}]} {
    %c0 = arith.constant 0 : index
    %c0_0 = arith.constant 0 : index
    %c0_1 = arith.constant 0 : index
    %0 = vector.load %arg1[%c0, %c0_0, %c0_1] : memref<8x16x64xbf16, #tpu.memory_space<vmem>>, vector<8x16x64xbf16>
    %1 = vector.shape_cast %0 : vector<8x16x64xbf16> to vector<128x64xbf16>
    %c0_2 = arith.constant 0 : index
    %c0_3 = arith.constant 0 : index
    %2 = vector.load %arg2[%c0_2, %c0_3] : memref<64x128xbf16, #tpu.memory_space<vmem>>, vector<64x128xbf16>
    %cst = arith.constant dense<0.000000e+00> : vector<128x128xf32>
    %3 = tpu.matmul %1, %2, %cst {dimension_numbers = #tpu.dot_dimension_numbers<[1], [0], [0], [1], [0, 0, 1, 1], [], []>} : vector<128x64xbf16>, vector<64x128xbf16>, vector<128x128xf32> -> vector<128x128xf32>
    %c0_4 = arith.constant 0 : index
    %c0_5 = arith.constant 0 : index
    %4 = vector.load %arg3[%c0_4, %c0_5] : memref<1x128xf32, #tpu.memory_space<vmem>>, vector<1x128xf32>
    %5 = vector.broadcast %4 : vector<1x128xf32> to vector<128x128xf32>
    %6 = arith.addf %3, %5 : vector<128x128xf32>
    %7 = arith.mulf %6, %6 : vector<128x128xf32>
    %8 = arith.mulf %6, %7 : vector<128x128xf32>
    %cst_6 = arith.constant 4.471500e-02 : f32
    %9 = vector.broadcast %cst_6 : f32 to vector<128x128xf32>
    %10 = arith.mulf %9, %8 : vector<128x128xf32>
    %11 = arith.addf %6, %10 : vector<128x128xf32>
    %cst_7 = arith.constant 0.797884583 : f32
    %12 = vector.broadcast %cst_7 : f32 to vector<128x128xf32>
    %13 = arith.mulf %12, %11 : vector<128x128xf32>
    %14 = math.tanh %13 : vector<128x128xf32>
    %cst_8 = arith.constant 1.000000e+00 : f32
    %15 = vector.broadcast %cst_8 : f32 to vector<128x128xf32>
    %16 = arith.addf %15, %14 : vector<128x128xf32>
    %cst_9 = arith.constant 5.000000e-01 : f32
    %17 = vector.broadcast %cst_9 : f32 to vector<128x128xf32>
    %18 = arith.mulf %17, %16 : vector<128x128xf32>
    %19 = arith.mulf %6, %18 : vector<128x128xf32>
    %20 = vector.shape_cast %19 : vector<128x128xf32> to vector<8x16x128xf32>
    %cst_10 = arith.constant dense<0.000000e+00> : vector<8x128xf32>
    %21 = vector.multi_reduction <add>, %20, %cst_10 [1] : vector<8x16x128xf32> to vector<8x128xf32>
    %cst_11 = arith.constant 6.250000e-02 : f32
    %22 = vector.broadcast %cst_11 : f32 to vector<8x128xf32>
    %23 = arith.mulf %21, %22 : vector<8x128xf32>
    %24 = arith.truncf %23 : vector<8x128xf32> to vector<8x128xbf16>
    %c0_12 = arith.constant 0 : index
    %c0_13 = arith.constant 0 : index
    %25 = vector.load %arg4[%c0_12, %c0_13] : memref<128x128xbf16, #tpu.memory_space<vmem>>, vector<128x128xbf16>
    %cst_14 = arith.constant dense<0.000000e+00> : vector<8x128xf32>
    %26 = tpu.matmul %24, %25, %cst_14 {dimension_numbers = #tpu.dot_dimension_numbers<[1], [0], [0], [1], [0, 0, 1, 1], [], []>} : vector<8x128xbf16>, vector<128x128xbf16>, vector<8x128xf32> -> vector<8x128xf32>
    %c0_15 = arith.constant 0 : index
    %c0_16 = arith.constant 0 : index
    %27 = vector.load %arg5[%c0_15, %c0_16] : memref<1x128xf32, #tpu.memory_space<vmem>>, vector<1x128xf32>
    %28 = vector.broadcast %27 : vector<1x128xf32> to vector<8x128xf32>
    %29 = arith.addf %26, %28 : vector<8x128xf32>
    %cst_17 = arith.constant 0.000000e+00 : f32
    %30 = vector.broadcast %cst_17 : f32 to vector<8x128xf32>
    %31 = arith.maximumf %29, %30 : vector<8x128xf32>
    %32 = arith.truncf %31 : vector<8x128xf32> to vector<8x128xbf16>
    %c0_18 = arith.constant 0 : index
    %c0_19 = arith.constant 0 : index
    %33 = vector.load %arg6[%c0_18, %c0_19] : memref<128x128xbf16, #tpu.memory_space<vmem>>, vector<128x128xbf16>
    %cst_20 = arith.constant dense<0.000000e+00> : vector<8x128xf32>
    %34 = tpu.matmul %32, %33, %cst_20 {dimension_numbers = #tpu.dot_dimension_numbers<[1], [0], [0], [1], [0, 0, 1, 1], [], []>} : vector<8x128xbf16>, vector<128x128xbf16>, vector<8x128xf32> -> vector<8x128xf32>
    %c0_21 = arith.constant 0 : index
    %c0_22 = arith.constant 0 : index
    %35 = vector.load %arg7[%c0_21, %c0_22] : memref<1x128xf32, #tpu.memory_space<vmem>>, vector<1x128xf32>
    %36 = vector.broadcast %35 : vector<1x128xf32> to vector<8x128xf32>
    %37 = arith.addf %34, %36 : vector<8x128xf32>
    %c0_23 = arith.constant 0 : index
    %c0_24 = arith.constant 0 : index
    %38 = vector.load %arg8[%c0_23, %c0_24] : memref<8x128xf32, #tpu.memory_space<vmem>>, vector<8x128xf32>
    tpu.vector_store %arg8[%c0_23, %c0_24], %37 {strides = array<i32>} : memref<8x128xf32, #tpu.memory_space<vmem>>, vector<8x128xf32>,
    return
  }
  func.func @transform_0(%arg0: i32) -> (i32, i32, i32) {
    %c0_i32 = arith.constant 0 : i32
    %c0_i32_0 = arith.constant 0 : i32
    %c0_i32_1 = arith.constant 0 : i32
    return %arg0, %c0_i32, %c0_i32_0 : i32, i32, i32
  }
  func.func @transform_1(%arg0: i32) -> (i32, i32) {
    %c0_i32 = arith.constant 0 : i32
    %c0_i32_0 = arith.constant 0 : i32
    %c0_i32_1 = arith.constant 0 : i32
    return %c0_i32, %c0_i32_0 : i32, i32
  }
  func.func @transform_2(%arg0: i32) -> (i32, i32) {
    %c0_i32 = arith.constant 0 : i32
    %c0_i32_0 = arith.constant 0 : i32
    %c0_i32_1 = arith.constant 0 : i32
    return %c0_i32, %c0_i32_0 : i32, i32
  }
  func.func @transform_3(%arg0: i32) -> (i32, i32) {
    %c0_i32 = arith.constant 0 : i32
    %c0_i32_0 = arith.constant 0 : i32
    %c0_i32_1 = arith.constant 0 : i32
    return %c0_i32, %c0_i32_0 : i32, i32
  }
  func.func @transform_4(%arg0: i32) -> (i32, i32) {
    %c0_i32 = arith.constant 0 : i32
    %c0_i32_0 = arith.constant 0 : i32
    %c0_i32_1 = arith.constant 0 : i32
    return %c0_i32, %c0_i32_0 : i32, i32
  }
  func.func @transform_5(%arg0: i32) -> (i32, i32) {
    %c0_i32 = arith.constant 0 : i32
    %c0_i32_0 = arith.constant 0 : i32
    %c0_i32_1 = arith.constant 0 : i32
    return %c0_i32, %c0_i32_0 : i32, i32
  }
  func.func @transform_6(%arg0: i32) -> (i32, i32) {
    %c0_i32 = arith.constant 0 : i32
    %c0_i32_0 = arith.constant 0 : i32
    %c0_i32_1 = arith.constant 0 : i32
    return %c0_i32, %c0_i32_0 : i32, i32
  }
  func.func @transform_7(%arg0: i32) -> (i32, i32) {
    %c0_i32 = arith.constant 0 : i32
    %c0_i32_0 = arith.constant 0 : i32
    return %arg0, %c0_i32 : i32, i32
  }
}

</mosaic_0001>

<llo_original>
// kernel: serial_model_forward.2
$region0: #{serial_model_forward.2}
  #allocation0 [shape = 'u32[]', space=smem, size = 0x4, offset = 0x4, fixed_abs, tag = 'smem constant byte address 0x4 - core index']
  #allocation1 [shape = 'u32[144,128]{1,0:T(1,128)}', space=vmem, size = 0x12000, scoped, tag = 'internal scratch']
  #allocation2 [shape = 'u32[2048]{0}', space=vmem, size = 0x2000, scoped, tag = 'scoped memory for serial_model_forward.2']
  #allocation3 [shape = 'u32[2048]{0}', space=vmem, size = 0x2000, scoped, tag = 'scoped memory for serial_model_forward.2']
  #allocation4 [shape = 'u32[2048]{0}', space=vmem, size = 0x2000, scoped, tag = 'scoped memory for serial_model_forward.2']
  #allocation5 [shape = 'u32[2048]{0}', space=vmem, size = 0x2000, scoped, tag = 'scoped memory for serial_model_forward.2']
  #allocation6 [shape = 'u32[2048]{0}', space=vmem, size = 0x2000, scoped, tag = 'scoped memory for serial_model_forward.2']
  %s0 = inlined_call_operand.vmem [shape: bf16[64,128], index: 0, kind: input, shape index: {}]
  %s1 = inlined_call_operand.vmem [shape: f32[1,128], index: 1, kind: input, shape index: {}]
  %s2 = inlined_call_operand.vmem [shape: bf16[128,128], index: 2, kind: input, shape index: {}]
  %s3 = inlined_call_operand.vmem [shape: f32[1,128], index: 3, kind: input, shape index: {}]
  %s4 = inlined_call_operand.vmem [shape: bf16[128,128], index: 4, kind: input, shape index: {}]
  %s5 = inlined_call_operand.vmem [shape: f32[1,128], index: 5, kind: input, shape index: {}]
  %s6 = inlined_call_operand.vmem [shape: bf16[2,16,64], index: 6, kind: input, shape index: {}]
  %s7 = inlined_call_operand.<no memory space> [shape: bf16[], index: 7, kind: input, shape index: {}]
  %s8 = inlined_call_operand.vmem [shape: f32[8,128], index: 8, kind: output, shape index: {}]
  %s9 = sld [smem:[#allocation0]]
  $region38: #{serial_model_forward.2} parent=0
    _
  %s11 = ssub.s32 1, %s9
  %s12 = scalar_select 0, %s11, %s9
  %v13 = vstv %s7
  %v14 = vunpack.i.l.bf16 %v13
  %v16 = vunpack.i.h.bf16 %v13
  $region1: #{serial_model_forward.2} parent=0
    #allocation7 [shape = 'u8[32768]{0}', space=vmem, size = 0x8000, dematerialized = true, scoped, tag = 'FusionAdapter Buffer %fusion.1 = bf16[8,16,64]{2,1,0:T(8,128)(2,1)} fusion(%param_6.1, %param_7), kind=kLoop, calls=%fused_computation.2.clone, metadata={op_name="jit(serial_model_forward)/jit(_pad)/pad" stack_frame_id=10}']
    // Predicated region
    $region2: #{serial_model_forward.2} parent=1 // pred_check
      _
    $region3: #{serial_model_forward.2} parent=1 // pred_check_branch
      %19 = sbr.rel (0) target = $region5
    $region4: #{serial_model_forward.2} parent=1 // pred_region
      _
    $region5: #{serial_model_forward.2} parent=1 // pred_fallthru
      _
    // Predicated region
    $region6: #{serial_model_forward.2} parent=1 // pred_check
      _
    $region7: #{serial_model_forward.2} parent=1 // pred_check_branch
      %21 = sbr.rel (0) target = $region9
    $region8: #{serial_model_forward.2} parent=1 // pred_region
      _
    $region9: #{serial_model_forward.2} parent=1 // pred_fallthru
      _
    // Predicated region
    $region10: #{serial_model_forward.2} parent=1 // pred_check
      _
    $region11: #{serial_model_forward.2} parent=1 // pred_check_branch
      %23 = sbr.rel (0) target = $region13
    $region12: #{serial_model_forward.2} parent=1 // pred_region
      _
    $region13: #{serial_model_forward.2} parent=1 // pred_fallthru
      _
    // Predicated region
    $region14: #{serial_model_forward.2} parent=1 // pred_check
      _
    $region15: #{serial_model_forward.2} parent=1 // pred_check_branch
      %25 = sbr.rel (0) target = $region17
    $region16: #{serial_model_forward.2} parent=1 // pred_region
      _
    $region17: #{serial_model_forward.2} parent=1 // pred_fallthru
      _
    // Predicated region
    $region18: #{serial_model_forward.2} parent=1 // pred_check
      _
    $region19: #{serial_model_forward.2} parent=1 // pred_check_branch
      %27 = sbr.rel (0) target = $region21
    $region20: #{serial_model_forward.2} parent=1 // pred_region
      _
    $region21: #{serial_model_forward.2} parent=1 // pred_fallthru
      _
    // Predicated region
    $region22: #{serial_model_forward.2} parent=1 // pred_check
      _
    $region23: #{serial_model_forward.2} parent=1 // pred_check_branch
      %29 = sbr.rel (0) target = $region25
    $region24: #{serial_model_forward.2} parent=1 // pred_region
      _
    $region25: #{serial_model_forward.2} parent=1 // pred_fallthru
      _
    // Predicated region
    $region26: #{serial_model_forward.2} parent=1 // pred_check
      _
    $region27: #{serial_model_forward.2} parent=1 // pred_check_branch
      %31 = sbr.rel (0) target = $region29
    $region28: #{serial_model_forward.2} parent=1 // pred_region
      _
    $region29: #{serial_model_forward.2} parent=1 // pred_fallthru
      _
    %s33 = sor.u32 255, 127
    %s34 = sand.u32 %s33, 85
    %s35 = sshrl.u32 %s34, 1
    %s36 = sor.u32 %s34, %s35
    %s37 = sand.u32 51, %s36
    %s38 = sshrl.u32 %s37, 2
    %s39 = sor.u32 %s37, %s38
    %s40 = sand.u32 15, %s39
    %v41 = vld [vmem:[%s6] sm:%s40]
    %v42 = vunpack.c.l.bf16 %v41
    %v43 = vunpack.c.h.bf16 %v41
    %v44 = vlaneseq
    %v45 = vand.u32 %v44, 127
    %vm47 = vcmp.lt.s32.totalorder %v45, 64
    %v48 = vsel %vm47, %v42, %v14
    %v49 = vpack.c.bf16 0.0, %v48
    %s51 = ssub.s32 16, 1
    %52 = vst [vmem:[#allocation7] sm:%s51] %v49
    %s53 = scalar_lea.vmem %s6, 4
    %s55 = sor.u32 255, 127
    %s56 = sand.u32 %s55, 85
    %s57 = sshrl.u32 %s56, 1
    %s58 = sor.u32 %s56, %s57
    %s59 = sand.u32 51, %s58
    %s60 = sshrl.u32 %s59, 2
    %s61 = sor.u32 %s59, %s60
    %s62 = sand.u32 15, %s61
    %v63 = vld [vmem:[%s53] sm:%s62]
    %v64 = vunpack.c.l.bf16 %v63
    %v65 = vunpack.c.h.bf16 %v63
    %v66 = vlaneseq
    %v67 = vand.u32 %v66, 127
    %vm69 = vcmp.lt.s32.totalorder %v67, 64
    %v70 = vsel %vm69, %v64, %v14
    %s71 = scalar_lea.vmem [#allocation7], 4
    %v72 = vpack.c.bf16 0.0, %v70
    %s74 = ssub.s32 16, 1
    %75 = vst [vmem:[%s71] sm:%s74] %v72
    %s76 = scalar_lea.vmem %s6, 8
    %s78 = sor.u32 255, 127
    %s79 = sand.u32 %s78, 85
    %s80 = sshrl.u32 %s79, 1
    %s81 = sor.u32 %s79, %s80
    %s82 = sand.u32 51, %s81
    %s83 = sshrl.u32 %s82, 2
    %s84 = sor.u32 %s82, %s83
    %s85 = sand.u32 15, %s84
    %v86 = vld [vmem:[%s76] sm:%s85]
    %v87 = vunpack.c.l.bf16 %v86
    %v88 = vunpack.c.h.bf16 %v86
    %v89 = vlaneseq
    %v90 = vand.u32 %v89, 127
    %vm92 = vcmp.lt.s32.totalorder %v90, 64
    %v93 = vsel %vm92, %v87, %v14
    %s94 = scalar_lea.vmem [#allocation7], 8
    %v95 = vpack.c.bf16 0.0, %v93
    %s97 = ssub.s32 16, 1
    %98 = vst [vmem:[%s94] sm:%s97] %v95
    %s99 = scalar_lea.vmem %s6, 12
    %s101 = sor.u32 255, 127
    %s102 = sand.u32 %s101, 85
    %s103 = sshrl.u32 %s102, 1
    %s104 = sor.u32 %s102, %s103
    %s105 = sand.u32 51, %s104
    %s106 = sshrl.u32 %s105, 2
    %s107 = sor.u32 %s105, %s106
    %s108 = sand.u32 15, %s107
    %v109 = vld [vmem:[%s99] sm:%s108]
    %v110 = vunpack.c.l.bf16 %v109
    %v111 = vunpack.c.h.bf16 %v109
    %v112 = vlaneseq
    %v113 = vand.u32 %v112, 127
    %vm115 = vcmp.lt.s32.totalorder %v113, 64
    %v116 = vsel %vm115, %v110, %v14
    %s117 = scalar_lea.vmem [#allocation7], 12
    %v118 = vpack.c.bf16 0.0, %v116
    %s120 = ssub.s32 16, 1
    %121 = vst [vmem:[%s117] sm:%s120] %v118
    %s122 = scalar_lea.vmem [#allocation7], 16
    %v123 = vpack.c.bf16 0.0, %v14
    %s125 = ssub.s32 16, 1
    %126 = vst [vmem:[%s122] sm:%s125] %v123
    %s127 = scalar_lea.vmem [#allocation7], 20
    %v128 = vpack.c.bf16 0.0, %v14
    %s130 = ssub.s32 16, 1
    %131 = vst [vmem:[%s127] sm:%s130] %v128
    %s132 = scalar_lea.vmem [#allocation7], 24
    %v133 = vpack.c.bf16 0.0, %v14
    %s135 = ssub.s32 16, 1
    %136 = vst [vmem:[%s132] sm:%s135] %v133
    %s137 = scalar_lea.vmem [#allocation7], 28
    %v138 = vpack.c.bf16 0.0, %v14
    %s140 = ssub.s32 16, 1
    %141 = vst [vmem:[%s137] sm:%s140] %v138
    %s142 = scalar_lea.vmem [#allocation7], 32
    %v143 = vpack.c.bf16 0.0, %v14
    %s145 = ssub.s32 16, 1
    %146 = vst [vmem:[%s142] sm:%s145] %v143
    %s147 = scalar_lea.vmem [#allocation7], 36
    %v148 = vpack.c.bf16 0.0, %v14
    %s150 = ssub.s32 16, 1
    %151 = vst [vmem:[%s147] sm:%s150] %v148
    %s152 = scalar_lea.vmem [#allocation7], 40
    %v153 = vpack.c.bf16 0.0, %v14
    %s155 = ssub.s32 16, 1
    %156 = vst [vmem:[%s152] sm:%s155] %v153
    %s157 = scalar_lea.vmem [#allocation7], 44
    %v158 = vpack.c.bf16 0.0, %v14
    %s160 = ssub.s32 16, 1
    %161 = vst [vmem:[%s157] sm:%s160] %v158
    %s162 = scalar_lea.vmem [#allocation7], 48
    %v163 = vpack.c.bf16 0.0, %v14
    %s165 = ssub.s32 16, 1
    %166 = vst [vmem:[%s162] sm:%s165] %v163
    %s167 = scalar_lea.vmem [#allocation7], 52
    %v168 = vpack.c.bf16 0.0, %v14
    %s170 = ssub.s32 16, 1
    %171 = vst [vmem:[%s167] sm:%s170] %v168
    %s172 = scalar_lea.vmem [#allocation7], 56
    %v173 = vpack.c.bf16 0.0, %v14
    %s175 = ssub.s32 16, 1
    %176 = vst [vmem:[%s172] sm:%s175] %v173
    %s177 = scalar_lea.vmem [#allocation7], 60
    %v178 = vpack.c.bf16 0.0, %v14
    %s180 = ssub.s32 16, 1
    %181 = vst [vmem:[%s177] sm:%s180] %v178
    %v183 = vld [vmem:[#allocation7] sm:$0xf]
    %v184 = vld [vmem:[#allocation7 + $0x4] sm:$0xf]
    %v185 = vld [vmem:[#allocation7 + $0x8] sm:$0xf]
    %v186 = vld [vmem:[#allocation7 + $0xc] sm:$0xf]
    %v187 = vld [vmem:[#allocation7 + $0x10] sm:$0xf]
    %v188 = vld [vmem:[#allocation7 + $0x14] sm:$0xf]
    %v189 = vld [vmem:[#allocation7 + $0x18] sm:$0xf]
    %v190 = vld [vmem:[#allocation7 + $0x1c] sm:$0xf]
    %v191 = vld [vmem:[#allocation7 + $0x20] sm:$0xf]
    %v192 = vld [vmem:[#allocation7 + $0x24] sm:$0xf]
    %v193 = vld [vmem:[#allocation7 + $0x28] sm:$0xf]
    %v194 = vld [vmem:[#allocation7 + $0x2c] sm:$0xf]
    %v195 = vld [vmem:[#allocation7 + $0x30] sm:$0xf]
    %v196 = vld [vmem:[#allocation7 + $0x34] sm:$0xf]
    %v197 = vld [vmem:[#allocation7 + $0x38] sm:$0xf]
    %v198 = vld [vmem:[#allocation7 + $0x3c] sm:$0xf]
    %v199 = vld [vmem:[%s0] sm:$0xf]
    %v200 = vld [vmem:[%s0 + $0x4] sm:$0xf]
    %v201 = vld [vmem:[%s0 + $0x8] sm:$0xf]
    %v202 = vld [vmem:[%s0 + $0xc] sm:$0xf]
    %v203 = vld [vmem:[%s0 + $0x10] sm:$0xf]
    %v204 = vld [vmem:[%s0 + $0x14] sm:$0xf]
    %v205 = vld [vmem:[%s0 + $0x18] sm:$0xf]
    %v206 = vld [vmem:[%s0 + $0x1c] sm:$0xf]
    %v207 = vld [vmem:[%s1] sm:$0x1]
    %v209 = vlaneseq
    %v210 = vshrl.u32 %v209, 7
    %v211 = vsub.s32 0, %v210
    %v212 = vrot.slane %v207, %v211
    %v230 = vunpack.c.l.b16 %v183
    %v231 = vunpack.c.l.b16 %v184
    %v232 = vunpack.c.l.b16 %v185
    %v233 = vunpack.c.l.b16 %v186
    %v234 = vunpack.c.l.b16 %v187
    %v235 = vunpack.c.l.b16 %v188
    %v236 = vunpack.c.l.b16 %v189
    %v237 = vunpack.c.l.b16 %v190
    %v238 = vunpack.c.l.b16 %v191
    %v239 = vunpack.c.l.b16 %v192
    %v240 = vunpack.c.l.b16 %v193
    %v241 = vunpack.c.l.b16 %v194
    %v242 = vunpack.c.l.b16 %v195
    %v243 = vunpack.c.l.b16 %v196
    %v244 = vunpack.c.l.b16 %v197
    %v245 = vunpack.c.l.b16 %v198
    %v246 = vpack.c.b16 %v231, %v230
    %v247 = vpack.c.b16 %v233, %v232
    %v248 = vpack.c.b16 %v235, %v234
    %v249 = vpack.c.b16 %v237, %v236
    %v250 = vpack.c.b16 %v239, %v238
    %v251 = vpack.c.b16 %v241, %v240
    %v252 = vpack.c.b16 %v243, %v242
    %v253 = vpack.c.b16 %v245, %v244
    %v262 = vunpack.c.l.b16 %v199
    %v263 = vunpack.c.l.b16 %v200
    %v264 = vunpack.c.l.b16 %v201
    %v265 = vunpack.c.l.b16 %v202
    %v266 = vunpack.c.l.b16 %v203
    %v267 = vunpack.c.l.b16 %v204
    %v268 = vunpack.c.l.b16 %v205
    %v269 = vunpack.c.l.b16 %v206
    %v270 = vpack.c.b16 %v263, %v262
    %v271 = vpack.c.b16 %v265, %v264
    %v272 = vpack.c.b16 %v267, %v266
    %v273 = vpack.c.b16 %v269, %v268
    %vm278 = vcmask 523264
    %v280 = vsel %vm278, %v246, 0
    %v283 = vsel %vm278, %v247, 0
    %v286 = vsel %vm278, %v248, 0
    %v289 = vsel %vm278, %v249, 0
    %v292 = vsel %vm278, %v250, 0
    %v295 = vsel %vm278, %v251, 0
    %v298 = vsel %vm278, %v252, 0
    %v301 = vsel %vm278, %v253, 0
    %303 = vmatprep.subr.bf16.mxu0 0
    %304 = vmatpush1.bf16.msra.mxu0 0
    %305 = vmatprep.subr.bf16.mxu0 0
    %306 = vmatpush1.bf16.msra.mxu0 0
    %307 = vmatprep.subr.bf16.mxu0 0
    %308 = vmatpush1.bf16.msra.mxu0 0
    %309 = vmatprep.subr.bf16.mxu0 0
    %310 = vmatpush1.bf16.msra.mxu0 0
    %311 = vmatprep.subr.bf16.mxu0 0
    %312 = vmatpush1.bf16.msra.mxu0 %v273
    %313 = vmatprep.subr.bf16.mxu0 0
    %314 = vmatpush1.bf16.msra.mxu0 %v272
    %315 = vmatprep.subr.bf16.mxu0 0
    %316 = vmatpush1.bf16.msra.mxu0 %v271
    %317 = vmatprep.subr.bf16.mxu0 0
    %318 = vmatpush1.bf16.msra.mxu0 %v270
    %319 = vmatprep.subr.bf16.mxu0 0
    %320 = vmatpush2.bf16.msra.mxu0 0
    %321 = vmatprep.subr.bf16.mxu0 0
    %322 = vmatpush2.bf16.msra.mxu0 0
    %323 = vmatprep.subr.bf16.mxu0 0
    %324 = vmatpush2.bf16.msra.mxu0 0
    %325 = vmatprep.subr.bf16.mxu0 0
    %326 = vmatpush2.bf16.msra.mxu0 0
    %327 = vmatprep.subr.bf16.mxu0 0
    %328 = vmatpush2.bf16.msra.mxu0 0
    %329 = vmatprep.subr.bf16.mxu0 0
    %330 = vmatpush2.bf16.msra.mxu0 0
    %331 = vmatprep.subr.bf16.mxu0 0
    %332 = vmatpush2.bf16.msra.mxu0 0
    %333 = vmatprep.subr.bf16.mxu0 0
    %334 = vmatpush2.bf16.msra.mxu0 0
    %335 = vmatprep.mubr.bf16.mxu0 0
    %336 = vmatmul.mubr.bf16.gmra.mxu0 %v280
    %v337 = vpop.f32.mrf.mxu0
    %v338 = vadd.f32 %v212, %v337
    %v339 = vpop.f32.mrf.mxu0
    %v340 = vpop.f32.mrf.mxu0
    %v341 = vadd.f32 %v212, %v340
    %v342 = vpop.f32.mrf.mxu0
    %343 = vmatprep.mubr.bf16.mxu0 0
    %344 = vmatmul.mubr.bf16.gmra.mxu0 %v283
    %v345 = vpop.f32.mrf.mxu0
    %v346 = vadd.f32 %v212, %v345
    %v347 = vpop.f32.mrf.mxu0
    %v348 = vpop.f32.mrf.mxu0
    %v349 = vadd.f32 %v212, %v348
    %v350 = vpop.f32.mrf.mxu0
    %351 = vmatprep.mubr.bf16.mxu0 0
    %352 = vmatmul.mubr.bf16.gmra.mxu0 %v286
    %v353 = vpop.f32.mrf.mxu0
    %v354 = vadd.f32 %v212, %v353
    %v355 = vpop.f32.mrf.mxu0
    %v356 = vpop.f32.mrf.mxu0
    %v357 = vadd.f32 %v212, %v356
    %v358 = vpop.f32.mrf.mxu0
    %359 = vmatprep.mubr.bf16.mxu0 0
    %360 = vmatmul.mubr.bf16.gmra.mxu0 %v289
    %v361 = vpop.f32.mrf.mxu0
    %v362 = vadd.f32 %v212, %v361
    %v363 = vpop.f32.mrf.mxu0
    %v364 = vpop.f32.mrf.mxu0
    %v365 = vadd.f32 %v212, %v364
    %v366 = vpop.f32.mrf.mxu0
    %367 = vmatprep.mubr.bf16.mxu0 0
    %368 = vmatmul.mubr.bf16.gmra.mxu0 %v292
    %v369 = vpop.f32.mrf.mxu0
    %v370 = vadd.f32 %v212, %v369
    %v371 = vpop.f32.mrf.mxu0
    %v372 = vpop.f32.mrf.mxu0
    %v373 = vadd.f32 %v212, %v372
    %v374 = vpop.f32.mrf.mxu0
    %375 = vmatprep.mubr.bf16.mxu0 0
    %376 = vmatmul.mubr.bf16.gmra.mxu0 %v295
    %v377 = vpop.f32.mrf.mxu0
    %v378 = vadd.f32 %v212, %v377
    %v379 = vpop.f32.mrf.mxu0
    %v380 = vpop.f32.mrf.mxu0
    %v381 = vadd.f32 %v212, %v380
    %v382 = vpop.f32.mrf.mxu0
    %383 = vmatprep.mubr.bf16.mxu0 0
    %384 = vmatmul.mubr.bf16.gmra.mxu0 %v298
    %v385 = vpop.f32.mrf.mxu0
    %v386 = vadd.f32 %v212, %v385
    %v387 = vpop.f32.mrf.mxu0
    %v388 = vpop.f32.mrf.mxu0
    %v389 = vadd.f32 %v212, %v388
    %v390 = vpop.f32.mrf.mxu0
    %391 = vmatprep.mubr.bf16.mxu0 0
    %392 = vmatmul.mubr.bf16.gmra.mxu0 %v301
    %v393 = vpop.f32.mrf.mxu0
    %v394 = vadd.f32 %v212, %v393
    %v395 = vpop.f32.mrf.mxu0
    %v396 = vpop.f32.mrf.mxu0
    %v397 = vadd.f32 %v212, %v396
    %v398 = vpop.f32.mrf.mxu0
    %399 = vdwg.mxu0
    %v400 = vmul.f32 %v338, %v338
    %v401 = vmul.f32 %v341, %v341
    %v402 = vmul.f32 %v346, %v346
    %v403 = vmul.f32 %v349, %v349
    %v404 = vmul.f32 %v354, %v354
    %v405 = vmul.f32 %v357, %v357
    %v406 = vmul.f32 %v362, %v362
    %v407 = vmul.f32 %v365, %v365
    %v408 = vmul.f32 %v370, %v370
    %v409 = vmul.f32 %v373, %v373
    %v410 = vmul.f32 %v378, %v378
    %v411 = vmul.f32 %v381, %v381
    %v412 = vmul.f32 %v386, %v386
    %v413 = vmul.f32 %v389, %v389
    %v414 = vmul.f32 %v394, %v394
    %v415 = vmul.f32 %v397, %v397
    %v416 = vmul.f32 %v338, %v400
    %v417 = vmul.f32 %v341, %v401
    %v418 = vmul.f32 %v346, %v402
    %v419 = vmul.f32 %v349, %v403
    %v420 = vmul.f32 %v354, %v404
    %v421 = vmul.f32 %v357, %v405
    %v422 = vmul.f32 %v362, %v406
    %v423 = vmul.f32 %v365, %v407
    %v424 = vmul.f32 %v370, %v408
    %v425 = vmul.f32 %v373, %v409
    %v426 = vmul.f32 %v378, %v410
    %v427 = vmul.f32 %v381, %v411
    %v428 = vmul.f32 %v386, %v412
    %v429 = vmul.f32 %v389, %v413
    %v430 = vmul.f32 %v394, %v414
    %v431 = vmul.f32 %v397, %v415
    %v432 = vmul.f32 %v416, 0.044715
    %v433 = vmul.f32 %v417, 0.044715
    %v434 = vmul.f32 %v418, 0.044715
    %v435 = vmul.f32 %v419, 0.044715
    %v436 = vmul.f32 %v420, 0.044715
    %v437 = vmul.f32 %v421, 0.044715
    %v438 = vmul.f32 %v422, 0.044715
    %v439 = vmul.f32 %v423, 0.044715
    %v440 = vmul.f32 %v424, 0.044715
    %v441 = vmul.f32 %v425, 0.044715
    %v442 = vmul.f32 %v426, 0.044715
    %v443 = vmul.f32 %v427, 0.044715
    %v444 = vmul.f32 %v428, 0.044715
    %v445 = vmul.f32 %v429, 0.044715
    %v446 = vmul.f32 %v430, 0.044715
    %v447 = vmul.f32 %v431, 0.044715
    %v448 = vadd.f32 %v338, %v432
    %v449 = vadd.f32 %v341, %v433
    %v450 = vadd.f32 %v346, %v434
    %v451 = vadd.f32 %v349, %v435
    %v452 = vadd.f32 %v354, %v436
    %v453 = vadd.f32 %v357, %v437
    %v454 = vadd.f32 %v362, %v438
    %v455 = vadd.f32 %v365, %v439
    %v456 = vadd.f32 %v370, %v440
    %v457 = vadd.f32 %v373, %v441
    %v458 = vadd.f32 %v378, %v442
    %v459 = vadd.f32 %v381, %v443
    %v460 = vadd.f32 %v386, %v444
    %v461 = vadd.f32 %v389, %v445
    %v462 = vadd.f32 %v394, %v446
    %v463 = vadd.f32 %v397, %v447
    %v464 = vmul.f32 %v448, 0.7978846
    %v465 = vmul.f32 %v449, 0.7978846
    %v466 = vmul.f32 %v450, 0.7978846
    %v467 = vmul.f32 %v451, 0.7978846
    %v468 = vmul.f32 %v452, 0.7978846
    %v469 = vmul.f32 %v453, 0.7978846
    %v470 = vmul.f32 %v454, 0.7978846
    %v471 = vmul.f32 %v455, 0.7978846
    %v472 = vmul.f32 %v456, 0.7978846
    %v473 = vmul.f32 %v457, 0.7978846
    %v474 = vmul.f32 %v458, 0.7978846
    %v475 = vmul.f32 %v459, 0.7978846
    %v476 = vmul.f32 %v460, 0.7978846
    %v477 = vmul.f32 %v461, 0.7978846
    %v478 = vmul.f32 %v462, 0.7978846
    %v479 = vmul.f32 %v463, 0.7978846
    %v480 = vtanh.pop %v464
    %v481 = vtanh.pop %v465
    %v482 = vtanh.pop %v466
    %v483 = vtanh.pop %v467
    %v484 = vtanh.pop %v468
    %v485 = vtanh.pop %v469
    %v486 = vtanh.pop %v470
    %v487 = vtanh.pop %v471
    %v488 = vtanh.pop %v472
    %v489 = vtanh.pop %v473
    %v490 = vtanh.pop %v474
    %v491 = vtanh.pop %v475
    %v492 = vtanh.pop %v476
    %v493 = vtanh.pop %v477
    %v494 = vtanh.pop %v478
    %v495 = vtanh.pop %v479
    %v496 = vadd.f32 %v480, 1.0
    %v497 = vadd.f32 %v481, 1.0
    %v498 = vadd.f32 %v482, 1.0
    %v499 = vadd.f32 %v483, 1.0
    %v500 = vadd.f32 %v484, 1.0
    %v501 = vadd.f32 %v485, 1.0
    %v502 = vadd.f32 %v486, 1.0
    %v503 = vadd.f32 %v487, 1.0
    %v504 = vadd.f32 %v488, 1.0
    %v505 = vadd.f32 %v489, 1.0
    %v506 = vadd.f32 %v490, 1.0
    %v507 = vadd.f32 %v491, 1.0
    %v508 = vadd.f32 %v492, 1.0
    %v509 = vadd.f32 %v493, 1.0
    %v510 = vadd.f32 %v494, 1.0
    %v511 = vadd.f32 %v495, 1.0
    %v512 = vmul.f32 %v496, 0.5
    %v513 = vmul.f32 %v497, 0.5
    %v514 = vmul.f32 %v498, 0.5
    %v515 = vmul.f32 %v499, 0.5
    %v516 = vmul.f32 %v500, 0.5
    %v517 = vmul.f32 %v501, 0.5
    %v518 = vmul.f32 %v502, 0.5
    %v519 = vmul.f32 %v503, 0.5
    %v520 = vmul.f32 %v504, 0.5
    %v521 = vmul.f32 %v505, 0.5
    %v522 = vmul.f32 %v506, 0.5
    %v523 = vmul.f32 %v507, 0.5
    %v524 = vmul.f32 %v508, 0.5
    %v525 = vmul.f32 %v509, 0.5
    %v526 = vmul.f32 %v510, 0.5
    %v527 = vmul.f32 %v511, 0.5
    %v528 = vmul.f32 %v338, %v512
    %v529 = vmul.f32 %v341, %v513
    %v530 = vmul.f32 %v346, %v514
    %v531 = vmul.f32 %v349, %v515
    %v532 = vmul.f32 %v354, %v516
    %v533 = vmul.f32 %v357, %v517
    %v534 = vmul.f32 %v362, %v518
    %v535 = vmul.f32 %v365, %v519
    %v536 = vmul.f32 %v370, %v520
    %v537 = vmul.f32 %v373, %v521
    %v538 = vmul.f32 %v378, %v522
    %v539 = vmul.f32 %v381, %v523
    %v540 = vmul.f32 %v386, %v524
    %v541 = vmul.f32 %v389, %v525
    %v542 = vmul.f32 %v394, %v526
    %v543 = vmul.f32 %v397, %v527
    %v544 = vadd.f32 %v528, %v529
    %v545 = vrot.slane %v544, 4
    %v546 = vadd.f32 %v544, %v545
    %v547 = vrot.slane %v546, 2
    %v548 = vadd.f32 %v546, %v547
    %v549 = vrot.slane %v548, 1
    %v550 = vadd.f32 %v548, %v549
    %v551 = vadd.f32 %v530, %v531
    %v552 = vrot.slane %v551, 4
    %v553 = vadd.f32 %v551, %v552
    %v554 = vrot.slane %v553, 2
    %v555 = vadd.f32 %v553, %v554
    %v556 = vrot.slane %v555, 1
    %v557 = vadd.f32 %v555, %v556
    %v558 = vadd.f32 %v532, %v533
    %v559 = vrot.slane %v558, 4
    %v560 = vadd.f32 %v558, %v559
    %v561 = vrot.slane %v560, 2
    %v562 = vadd.f32 %v560, %v561
    %v563 = vrot.slane %v562, 1
    %v564 = vadd.f32 %v562, %v563
    %v565 = vadd.f32 %v534, %v535
    %v566 = vrot.slane %v565, 4
    %v567 = vadd.f32 %v565, %v566
    %v568 = vrot.slane %v567, 2
    %v569 = vadd.f32 %v567, %v568
    %v570 = vrot.slane %v569, 1
    %v571 = vadd.f32 %v569, %v570
    %v572 = vadd.f32 %v536, %v537
    %v573 = vrot.slane %v572, 4
    %v574 = vadd.f32 %v572, %v573
    %v575 = vrot.slane %v574, 2
    %v576 = vadd.f32 %v574, %v575
    %v577 = vrot.slane %v576, 1
    %v578 = vadd.f32 %v576, %v577
    %v579 = vadd.f32 %v538, %v539
    %v580 = vrot.slane %v579, 4
    %v581 = vadd.f32 %v579, %v580
    %v582 = vrot.slane %v581, 2
    %v583 = vadd.f32 %v581, %v582
    %v584 = vrot.slane %v583, 1
    %v585 = vadd.f32 %v583, %v584
    %v586 = vadd.f32 %v540, %v541
    %v587 = vrot.slane %v586, 4
    %v588 = vadd.f32 %v586, %v587
    %v589 = vrot.slane %v588, 2
    %v590 = vadd.f32 %v588, %v589
    %v591 = vrot.slane %v590, 1
    %v592 = vadd.f32 %v590, %v591
    %v593 = vadd.f32 %v542, %v543
    %v594 = vrot.slane %v593, 4
    %v595 = vadd.f32 %v593, %v594
    %v596 = vrot.slane %v595, 2
    %v597 = vadd.f32 %v595, %v596
    %v598 = vrot.slane %v597, 1
    %v599 = vadd.f32 %v597, %v598
    %v600 = vmul.f32 %v550, 0.0625
    %v601 = vmul.f32 %v557, 0.0625
    %v602 = vmul.f32 %v564, 0.0625
    %v603 = vmul.f32 %v571, 0.0625
    %v604 = vmul.f32 %v578, 0.0625
    %v605 = vmul.f32 %v585, 0.0625
    %v606 = vmul.f32 %v592, 0.0625
    %v607 = vmul.f32 %v599, 0.0625
    %v608 = vpack.c.bf16 %v600, %v600
    %v609 = vpack.c.bf16 %v601, %v601
    %v610 = vpack.c.bf16 %v602, %v602
    %v611 = vpack.c.bf16 %v603, %v603
    %v612 = vpack.c.bf16 %v604, %v604
    %v613 = vpack.c.bf16 %v605, %v605
    %v614 = vpack.c.bf16 %v606, %v606
    %v615 = vpack.c.bf16 %v607, %v607
    %v616 = vld [vmem:[%s2] sm:$0xf]
    %v617 = vld [vmem:[%s2 + $0x4] sm:$0xf]
    %v618 = vld [vmem:[%s2 + $0x8] sm:$0xf]
    %v619 = vld [vmem:[%s2 + $0xc] sm:$0xf]
    %v620 = vld [vmem:[%s2 + $0x10] sm:$0xf]
    %v621 = vld [vmem:[%s2 + $0x14] sm:$0xf]
    %v622 = vld [vmem:[%s2 + $0x18] sm:$0xf]
    %v623 = vld [vmem:[%s2 + $0x1c] sm:$0xf]
    %v624 = vld [vmem:[%s2 + $0x20] sm:$0xf]
    %v625 = vld [vmem:[%s2 + $0x24] sm:$0xf]
    %v626 = vld [vmem:[%s2 + $0x28] sm:$0xf]
    %v627 = vld [vmem:[%s2 + $0x2c] sm:$0xf]
    %v628 = vld [vmem:[%s2 + $0x30] sm:$0xf]
    %v629 = vld [vmem:[%s2 + $0x34] sm:$0xf]
    %v630 = vld [vmem:[%s2 + $0x38] sm:$0xf]
    %v631 = vld [vmem:[%s2 + $0x3c] sm:$0xf]
    %v632 = vld [vmem:[%s3] sm:$0x1]
    %v634 = vlaneseq
    %v635 = vshrl.u32 %v634, 7
    %v636 = vsub.s32 0, %v635
    %v637 = vrot.slane %v632, %v636
    %v647 = vunpack.c.l.b16 %v608
    %v648 = vunpack.c.l.b16 %v609
    %v649 = vunpack.c.l.b16 %v610
    %v650 = vunpack.c.l.b16 %v611
    %v651 = vunpack.c.l.b16 %v612
    %v652 = vunpack.c.l.b16 %v613
    %v653 = vunpack.c.l.b16 %v614
    %v654 = vunpack.c.l.b16 %v615
    %vm655 = vcmask 1041409
    %v656 = vsel %vm655, %v648, %v647
    %vm657 = vcmask 1042434
    %v658 = vsel %vm657, %v649, %v656
    %vm659 = vcmask 1043459
    %v660 = vsel %vm659, %v650, %v658
    %vm661 = vcmask 1044484
    %v662 = vsel %vm661, %v651, %v660
    %vm663 = vcmask 1045509
    %v664 = vsel %vm663, %v652, %v662
    %vm665 = vcmask 1046534
    %v666 = vsel %vm665, %v653, %v664
    %vm667 = vcmask 1047559
    %v668 = vsel %vm667, %v654, %v666
    %v669 = vpack.c.b16 %v668, %v668
    %v687 = vunpack.c.l.b16 %v616
    %v688 = vunpack.c.l.b16 %v617
    %v689 = vunpack.c.l.b16 %v618
    %v690 = vunpack.c.l.b16 %v619
    %v691 = vunpack.c.l.b16 %v620
    %v692 = vunpack.c.l.b16 %v621
    %v693 = vunpack.c.l.b16 %v622
    %v694 = vunpack.c.l.b16 %v623
    %v695 = vunpack.c.l.b16 %v624
    %v696 = vunpack.c.l.b16 %v625
    %v697 = vunpack.c.l.b16 %v626
    %v698 = vunpack.c.l.b16 %v627
    %v699 = vunpack.c.l.b16 %v628
    %v700 = vunpack.c.l.b16 %v629
    %v701 = vunpack.c.l.b16 %v630
    %v702 = vunpack.c.l.b16 %v631
    %v703 = vpack.c.b16 %v688, %v687
    %v704 = vpack.c.b16 %v690, %v689
    %v705 = vpack.c.b16 %v692, %v691
    %v706 = vpack.c.b16 %v694, %v693
    %v707 = vpack.c.b16 %v696, %v695
    %v708 = vpack.c.b16 %v698, %v697
    %v709 = vpack.c.b16 %v700, %v699
    %v710 = vpack.c.b16 %v702, %v701
    %719 = vmatprep.subr.bf16.mxu0 0
    %720 = vmatpush1.bf16.msra.mxu0 %v710
    %721 = vmatprep.subr.bf16.mxu0 0
    %722 = vmatpush1.bf16.msra.mxu0 %v709
    %723 = vmatprep.subr.bf16.mxu0 0
    %724 = vmatpush1.bf16.msra.mxu0 %v708
    %725 = vmatprep.subr.bf16.mxu0 0
    %726 = vmatpush1.bf16.msra.mxu0 %v707
    %727 = vmatprep.subr.bf16.mxu0 0
    %728 = vmatpush1.bf16.msra.mxu0 %v706
    %729 = vmatprep.subr.bf16.mxu0 0
    %730 = vmatpush1.bf16.msra.mxu0 %v705
    %731 = vmatprep.subr.bf16.mxu0 0
    %732 = vmatpush1.bf16.msra.mxu0 %v704
    %733 = vmatprep.subr.bf16.mxu0 0
    %734 = vmatpush1.bf16.msra.mxu0 %v703
    %735 = vmatprep.subr.bf16.mxu0 0
    %736 = vmatpush2.bf16.msra.mxu0 0
    %737 = vmatprep.subr.bf16.mxu0 0
    %738 = vmatpush2.bf16.msra.mxu0 0
    %739 = vmatprep.subr.bf16.mxu0 0
    %740 = vmatpush2.bf16.msra.mxu0 0
    %741 = vmatprep.subr.bf16.mxu0 0
    %742 = vmatpush2.bf16.msra.mxu0 0
    %743 = vmatprep.subr.bf16.mxu0 0
    %744 = vmatpush2.bf16.msra.mxu0 0
    %745 = vmatprep.subr.bf16.mxu0 0
    %746 = vmatpush2.bf16.msra.mxu0 0
    %747 = vmatprep.subr.bf16.mxu0 0
    %748 = vmatpush2.bf16.msra.mxu0 0
    %749 = vmatprep.subr.bf16.mxu0 0
    %750 = vmatpush2.bf16.msra.mxu0 0
    %751 = vmatprep.mubr.bf16.mxu0 0
    %752 = vmatmul.mubr.bf16.gmra.mxu0 %v669
    %v753 = vpop.f32.mrf.mxu0
    %v754 = vadd.f32 %v637, %v753
    %v755 = vpop.f32.mrf.mxu0
    %v756 = vpop.f32.mrf.mxu0
    %v757 = vpop.f32.mrf.mxu0
    %758 = vdwg.mxu0
    %v759 = vmax.f32 %v754, 0.0
    %v760 = vpack.c.bf16 %v759, %v759
    %v761 = vld [vmem:[%s4] sm:$0xf]
    %v762 = vld [vmem:[%s4 + $0x4] sm:$0xf]
    %v763 = vld [vmem:[%s4 + $0x8] sm:$0xf]
    %v764 = vld [vmem:[%s4 + $0xc] sm:$0xf]
    %v765 = vld [vmem:[%s4 + $0x10] sm:$0xf]
    %v766 = vld [vmem:[%s4 + $0x14] sm:$0xf]
    %v767 = vld [vmem:[%s4 + $0x18] sm:$0xf]
    %v768 = vld [vmem:[%s4 + $0x1c] sm:$0xf]
    %v769 = vld [vmem:[%s4 + $0x20] sm:$0xf]
    %v770 = vld [vmem:[%s4 + $0x24] sm:$0xf]
    %v771 = vld [vmem:[%s4 + $0x28] sm:$0xf]
    %v772 = vld [vmem:[%s4 + $0x2c] sm:$0xf]
    %v773 = vld [vmem:[%s4 + $0x30] sm:$0xf]
    %v774 = vld [vmem:[%s4 + $0x34] sm:$0xf]
    %v775 = vld [vmem:[%s4 + $0x38] sm:$0xf]
    %v776 = vld [vmem:[%s4 + $0x3c] sm:$0xf]
    %v777 = vld [vmem:[%s5] sm:$0x1]
    %v779 = vlaneseq
    %v780 = vshrl.u32 %v779, 7
    %v781 = vsub.s32 0, %v780
    %v782 = vrot.slane %v777, %v781
    %v800 = vunpack.c.l.b16 %v761
    %v801 = vunpack.c.l.b16 %v762
    %v802 = vunpack.c.l.b16 %v763
    %v803 = vunpack.c.l.b16 %v764
    %v804 = vunpack.c.l.b16 %v765
    %v805 = vunpack.c.l.b16 %v766
    %v806 = vunpack.c.l.b16 %v767
    %v807 = vunpack.c.l.b16 %v768
    %v808 = vunpack.c.l.b16 %v769
    %v809 = vunpack.c.l.b16 %v770
    %v810 = vunpack.c.l.b16 %v771
    %v811 = vunpack.c.l.b16 %v772
    %v812 = vunpack.c.l.b16 %v773
    %v813 = vunpack.c.l.b16 %v774
    %v814 = vunpack.c.l.b16 %v775
    %v815 = vunpack.c.l.b16 %v776
    %v816 = vpack.c.b16 %v801, %v800
    %v817 = vpack.c.b16 %v803, %v802
    %v818 = vpack.c.b16 %v805, %v804
    %v819 = vpack.c.b16 %v807, %v806
    %v820 = vpack.c.b16 %v809, %v808
    %v821 = vpack.c.b16 %v811, %v810
    %v822 = vpack.c.b16 %v813, %v812
    %v823 = vpack.c.b16 %v815, %v814
    %832 = vmatprep.subr.bf16.mxu0 0
    %833 = vmatpush1.bf16.msra.mxu0 %v823
    %834 = vmatprep.subr.bf16.mxu0 0
    %835 = vmatpush1.bf16.msra.mxu0 %v822
    %836 = vmatprep.subr.bf16.mxu0 0
    %837 = vmatpush1.bf16.msra.mxu0 %v821
    %838 = vmatprep.subr.bf16.mxu0 0
    %839 = vmatpush1.bf16.msra.mxu0 %v820
    %840 = vmatprep.subr.bf16.mxu0 0
    %841 = vmatpush1.bf16.msra.mxu0 %v819
    %842 = vmatprep.subr.bf16.mxu0 0
    %843 = vmatpush1.bf16.msra.mxu0 %v818
    %844 = vmatprep.subr.bf16.mxu0 0
    %845 = vmatpush1.bf16.msra.mxu0 %v817
    %846 = vmatprep.subr.bf16.mxu0 0
    %847 = vmatpush1.bf16.msra.mxu0 %v816
    %848 = vmatprep.subr.bf16.mxu0 0
    %849 = vmatpush2.bf16.msra.mxu0 0
    %850 = vmatprep.subr.bf16.mxu0 0
    %851 = vmatpush2.bf16.msra.mxu0 0
    %852 = vmatprep.subr.bf16.mxu0 0
    %853 = vmatpush2.bf16.msra.mxu0 0
    %854 = vmatprep.subr.bf16.mxu0 0
    %855 = vmatpush2.bf16.msra.mxu0 0
    %856 = vmatprep.subr.bf16.mxu0 0
    %857 = vmatpush2.bf16.msra.mxu0 0
    %858 = vmatprep.subr.bf16.mxu0 0
    %859 = vmatpush2.bf16.msra.mxu0 0
    %860 = vmatprep.subr.bf16.mxu0 0
    %861 = vmatpush2.bf16.msra.mxu0 0
    %862 = vmatprep.subr.bf16.mxu0 0
    %863 = vmatpush2.bf16.msra.mxu0 0
    %864 = vmatprep.mubr.bf16.mxu0 0
    %865 = vmatmul.mubr.bf16.gmra.mxu0 %v760
    %v866 = vpop.f32.mrf.mxu0
    %v867 = vadd.f32 %v782, %v866
    %v868 = vpop.f32.mrf.mxu0
    %v869 = vpop.f32.mrf.mxu0
    %v870 = vpop.f32.mrf.mxu0
    %871 = vdwg.mxu0
    %872 = vst [vmem:[%s8] sm:$0xff] %v867
    // Predicated region
    $region30: #{serial_model_forward.2} parent=1 // pred_check
      _
    $region31: #{serial_model_forward.2} parent=1 // pred_check_branch
      %874 = sbr.rel (0) target = $region33
    $region32: #{serial_model_forward.2} parent=1 // pred_region
      _
    $region33: #{serial_model_forward.2} parent=1 // pred_fallthru
      _
    // Predicated region
    $region34: #{serial_model_forward.2} parent=1 // pred_check
      _
    $region35: #{serial_model_forward.2} parent=1 // pred_check_branch
      %876 = sbr.rel (0) target = $region37
    $region36: #{serial_model_forward.2} parent=1 // pred_region
      _
    $region37: #{serial_model_forward.2} parent=1 // pred_fallthru
      _

</llo_original>
